<compile_context>
chip_gen: v5e
topology: v5e:2x2
jax: 0.10.0
libtpu: 0.0.40
codegen_flags: <defaults>
</compile_context>

<pallas_src>
import jax
import jax.numpy as jnp
from jax.experimental import pallas as pl
from jax.experimental.pallas import tpu as pltpu

NUM_CATEGORY_VARIABLES = 9
NUM_TAGS = 31
TEXT_DIM = 768
HIDDEN = 128
BN_EPS = 1e-5


def fused_mlp_kernel(misc_ref, dsc_ref, use_ref,
                     w_misc_ref, w_dsc_ref, w_use_ref,
                     b1_ref, w2_ref, b2_ref, out_ref):
    """Segment inputs (TB, *) -> folded Linear+BN -> ReLU -> 128->1 reduce -> (1, TB)."""
    # First layer: three segment matmuls.  Activations are cast to bf16 at the MXU
    # input *inside* the kernel (no wrapper-side cast round trip through HBM); the
    # cast is a no-op when the producer already emitted bf16.  Accumulation is f32.
    h = jnp.dot(misc_ref[...].astype(jnp.bfloat16), w_misc_ref[...],
                preferred_element_type=jnp.float32)
    h = h + jnp.dot(dsc_ref[...].astype(jnp.bfloat16), w_dsc_ref[...],
                    preferred_element_type=jnp.float32)
    h = h + jnp.dot(use_ref[...].astype(jnp.bfloat16), w_use_ref[...],
                    preferred_element_type=jnp.float32)
    h = h + b1_ref[...]                      # BatchNorm(eval) folded into b1 / weights
    h = jnp.maximum(h, 0.0)                  # ReLU; Dropout is identity in eval mode
    # Second layer (128 -> 1): VPU multiply + lane reduction, not an N=1 MXU matmul.
    # (Kernel is HBM-bound; these f32 VPU adds/reduces hide under the DMA anyway.)
    o = jnp.sum(h * w2_ref[...], axis=-1) + b2_ref[0]        # (TB,)
    out_ref[...] = o[None, :]                                 # lane-dense (1, TB) store


def pallas_mlp_head(misc, dsc, use, w_misc, w_dsc, w_use, b1, w2_row, b2, *, tb):
    b_pad = misc.shape[0]
    grid = (b_pad // tb,)

    def batch_spec(width):
        return pl.BlockSpec((tb, width), lambda i: (i, 0))

    def resident_spec(arr):           # weights: same block every step -> VMEM-resident
        return pl.BlockSpec(arr.shape, lambda i: (0, 0))

    # Derive a VMEM budget from the real double-buffered footprint so large batch
    # tiles are not rejected by the default scoped limits (16 MiB v5e / 32 MiB
    # v6e,v7x); cap at 64 MiB so we never ask for more than v7x physically has.
    act_bytes = sum(2 * tb * a.shape[1] * jnp.dtype(a.dtype).itemsize
                    for a in (misc, dsc, use))
    wt_bytes = sum(2 * w.size * jnp.dtype(w.dtype).itemsize
                   for w in (w_misc, w_dsc, w_use, b1, w2_row))
    out_bytes = 2 * tb * 4
    vmem_limit = int(min(64 * 1024 * 1024,
                         max(32 * 1024 * 1024,
                             1.5 * (act_bytes + wt_bytes + out_bytes))))

    out = pl.pallas_call(
        fused_mlp_kernel,
        out_shape=jax.ShapeDtypeStruct((grid[0], tb), jnp.float32),
        grid=grid,
        in_specs=[
            batch_spec(misc.shape[1]),
            batch_spec(dsc.shape[1]),
            batch_spec(use.shape[1]),
            resident_spec(w_misc),
            resident_spec(w_dsc),
            resident_spec(w_use),
            resident_spec(b1),
            resident_spec(w2_row),
            pl.BlockSpec(memory_space=pltpu.MemorySpace.SMEM),   # b2 scalar
        ],
        out_specs=pl.BlockSpec((1, tb), lambda i: (i, 0)),
        compiler_params=pltpu.CompilerParams(
            dimension_semantics=("parallel",),
            vmem_limit_bytes=vmem_limit),
    )(misc, dsc, use, w_misc, w_dsc, w_use, b1, w2_row, b2)
    return out.reshape(-1)


def _choose_tb(batch):
    """Batch-tile heuristic: multiples of 128 when possible (lane-dense output
    stores, full bf16 packed tiles), big enough to amortize the ~0.35 us per-grid-
    step overhead (up to 1024 rows), and >=2 grid steps for larger batches so
    v7x's two TensorCores both get sharded work."""
    if batch <= 128:
        return max(8, ((batch + 7) // 8) * 8)        # single small tile
    half = ((-(-batch // 2)) + 127) // 128 * 128     # ceil(B/2) rounded up to 128
    return min(1024, half)


def init_raw_params(key, num_embeddings, embedding_dim):
    in_features = NUM_CATEGORY_VARIABLES * embedding_dim + TEXT_DIM + TEXT_DIM + NUM_TAGS
    ks = jax.random.split(key, 8)
    return {
        "emb_table": jax.random.normal(ks[0], (num_embeddings, embedding_dim), jnp.float32),
        "w1": jax.random.normal(ks[1], (in_features, HIDDEN), jnp.float32) * 0.02,
        "b1": jax.random.normal(ks[2], (1, HIDDEN), jnp.float32) * 0.01,
        "gamma": 1.0 + 0.1 * jax.random.normal(ks[3], (1, HIDDEN), jnp.float32),
        "beta": 0.1 * jax.random.normal(ks[4], (1, HIDDEN), jnp.float32),
        "mean": 0.1 * jax.random.normal(ks[5], (1, HIDDEN), jnp.float32),
        "var": jnp.abs(1.0 + 0.1 * jax.random.normal(ks[6], (1, HIDDEN), jnp.float32)),
        "w2": jax.random.normal(ks[7], (HIDDEN, 1), jnp.float32) * 0.02,
        "b2": jnp.zeros((1, 1), jnp.float32),
    }


def prepare_params(raw, embedding_dim):
    """One-time prep: fold eval-mode BN into (w1, b1), split w1 by input segment,
    zero-pad the small (cat+tags) segment to a multiple of 128, cast weights to bf16."""
    cat_w = NUM_CATEGORY_VARIABLES * embedding_dim                  # 288 for D=32
    scale = raw["gamma"] * jax.lax.rsqrt(raw["var"] + BN_EPS)       # (1, HIDDEN)
    w1 = raw["w1"] * scale                                          # affine fold (exact)
    b1 = (raw["b1"] - raw["mean"]) * scale + raw["beta"]

    w_cat = w1[:cat_w]
    w_dsc = w1[cat_w:cat_w + TEXT_DIM]
    w_use = w1[cat_w + TEXT_DIM:cat_w + 2 * TEXT_DIM]
    w_tag = w1[cat_w + 2 * TEXT_DIM:]

    misc_w = cat_w + NUM_TAGS                                       # 319
    misc_pad = ((misc_w + 127) // 128) * 128                        # 384 (lane-aligned)
    w_misc = jnp.concatenate(
        [w_cat, w_tag, jnp.zeros((misc_pad - misc_w, HIDDEN), jnp.float32)], axis=0)

    return {
        "emb_table": raw["emb_table"],
        "w_misc": w_misc.astype(jnp.bfloat16),
        "w_dsc": w_dsc.astype(jnp.bfloat16),
        "w_use": w_use.astype(jnp.bfloat16),
        "b1": b1,                                                   # f32
        "w2": raw["w2"].reshape(1, HIDDEN),                         # f32 row
        "b2": raw["b2"].reshape(1),                                 # f32 scalar (SMEM)
        "misc_pad": int(misc_pad),
    }


def model_forward(prep, category_ids, text_dsc, text_use, tags, *, tb=None):
    B = category_ids.shape[0]
    # nn.Embedding lookup + flatten (tiny gather, stays in plain JAX).
    emb = jnp.take(prep["emb_table"], category_ids, axis=0)         # (B, 9, D)
    cat_flat = emb.reshape(B, -1)                                   # (B, 9*D)
    # Concat + lane-pad merged into a single op producing the 384-wide misc segment
    # directly; the full 1855-wide activation is never materialized.
    pad_cols = prep["misc_pad"] - (cat_flat.shape[1] + tags.shape[1])
    misc = jnp.concatenate(
        [cat_flat, tags.astype(cat_flat.dtype),
         jnp.zeros((B, pad_cols), cat_flat.dtype)], axis=1)          # (B, 384)

    if tb is None:
        tb = _choose_tb(B)
    b_pad = ((B + tb - 1) // tb) * tb

    def pad_b(x):
        return x if b_pad == B else jnp.pad(x, ((0, b_pad - B), (0, 0)))

    # NO wrapper-side dtype casts on the activation streams: text streams are fed in
    # the producer's dtype (bf16 stand-in RoBERTa output in the demo, f32 otherwise)
    # and the bf16 cast for the MXU happens inside the kernel.
    misc = pad_b(misc)
    dsc = pad_b(text_dsc)
    use = pad_b(text_use)

    out = pallas_mlp_head(misc, dsc, use,
                          prep["w_misc"], prep["w_dsc"], prep["w_use"],
                          prep["b1"], prep["w2"], prep["b2"], tb=tb)
    return out[:B]                                                  # torch.flatten


def reference_forward(raw, category_ids, text_dsc, text_use, tags):
    emb = jnp.take(raw["emb_table"], category_ids, axis=0)
    cat_flat = emb.reshape(emb.shape[0], -1)
    x = jnp.concatenate([cat_flat, text_dsc, text_use, tags], axis=1)
    h = x @ raw["w1"] + raw["b1"]
    h = (h - raw["mean"]) * raw["gamma"] * jax.lax.rsqrt(raw["var"] + BN_EPS) + raw["beta"]
    h = jnp.maximum(h, 0.0)
    return (h @ raw["w2"] + raw["b2"]).reshape(-1)


if __name__ == "__main__":
    B = 8
    num_embeddings = 50
    embedding_dim = 32

    key = jax.random.PRNGKey(0)
    k_par, k_ids, k_dsc, k_use, k_tags = jax.random.split(key, 5)

    raw = init_raw_params(k_par, num_embeddings, embedding_dim)
    prep = prepare_params(raw, embedding_dim)

    category_ids = jax.random.randint(k_ids, (B, NUM_CATEGORY_VARIABLES), 0, num_embeddings)
    # Stand-in RoBERTa [CLS] outputs; the "producer" emits bf16 directly so the kernel
    # streams 2 B/elem from HBM with no cast round trip.
    text_dsc = jax.random.normal(k_dsc, (B, TEXT_DIM), jnp.float32).astype(jnp.bfloat16)
    text_use = jax.random.normal(k_use, (B, TEXT_DIM), jnp.float32).astype(jnp.bfloat16)
    tags = jax.random.normal(k_tags, (B, NUM_TAGS), jnp.float32)

    out = jax.block_until_ready(model_forward(prep, category_ids, text_dsc, text_use, tags))
    ref = jax.block_until_ready(reference_forward(
        raw, category_ids,
        text_dsc.astype(jnp.float32), text_use.astype(jnp.float32), tags))

    assert out.shape == (B,), out.shape
    # bf16 weights / bf16 text activations (f32 accumulation) -> loosened tolerance.
    max_err = jnp.max(jnp.abs(out - ref))
    assert jnp.allclose(out, ref, atol=5e-2, rtol=5e-2), (out, ref, max_err)
    print("KERNEL_OK")
</pallas_src>

<mosaic_0001>
module attributes {stable_mosaic.version = 11 : i64} {
  func.func @fused_mlp_kernel(%arg0: i32, %arg1: memref<8x384xf32, #tpu.memory_space<vmem>>, %arg2: memref<8x768xbf16, #tpu.memory_space<vmem>>, %arg3: memref<8x768xbf16, #tpu.memory_space<vmem>>, %arg4: memref<384x128xbf16, #tpu.memory_space<vmem>>, %arg5: memref<768x128xbf16, #tpu.memory_space<vmem>>, %arg6: memref<768x128xbf16, #tpu.memory_space<vmem>>, %arg7: memref<1x128xf32, #tpu.memory_space<vmem>>, %arg8: memref<1x128xf32, #tpu.memory_space<vmem>>, %arg9: memref<1xf32, #tpu.memory_space<smem>>, %arg10: memref<1x8xf32, #tpu.memory_space<vmem>>) attributes {dimension_semantics = [#tpu.dimension_semantics<parallel>], iteration_bounds = array<i64: 1>, scalar_prefetch = 0 : i64, scratch_operands = 0 : i64, tpu.core_type = #tpu.core_type<tc>, window_params = [{transform_indices = @transform_0, window_bounds = array<i64: 8, 384>}, {transform_indices = @transform_1, window_bounds = array<i64: 8, 768>}, {transform_indices = @transform_2, window_bounds = array<i64: 8, 768>}, {pipeline_mode = #tpu.pipeline_mode<synchronous>, transform_indices = @transform_3, window_bounds = array<i64: 384, 128>}, {pipeline_mode = #tpu.pipeline_mode<synchronous>, transform_indices = @transform_4, window_bounds = array<i64: 768, 128>}, {pipeline_mode = #tpu.pipeline_mode<synchronous>, transform_indices = @transform_5, window_bounds = array<i64: 768, 128>}, {pipeline_mode = #tpu.pipeline_mode<synchronous>, transform_indices = @transform_6, window_bounds = array<i64: 1, 128>}, {pipeline_mode = #tpu.pipeline_mode<synchronous>, transform_indices = @transform_7, window_bounds = array<i64: 1, 128>}, {transform_indices = @transform_8, window_bounds = array<i64: 1>}, {transform_indices = @transform_9, window_bounds = array<i64: 1, 8>}]} {
    %c0 = arith.constant 0 : index
    %c0_0 = arith.constant 0 : index
    %0 = vector.load %arg1[%c0, %c0_0] : memref<8x384xf32, #tpu.memory_space<vmem>>, vector<8x384xf32>
    %1 = arith.truncf %0 : vector<8x384xf32> to vector<8x384xbf16>
    %c0_1 = arith.constant 0 : index
    %c0_2 = arith.constant 0 : index
    %2 = vector.load %arg4[%c0_1, %c0_2] : memref<384x128xbf16, #tpu.memory_space<vmem>>, vector<384x128xbf16>
    %cst = arith.constant dense<0.000000e+00> : vector<8x128xf32>
    %3 = tpu.matmul %1, %2, %cst {dimension_numbers = #tpu.dot_dimension_numbers<[1], [0], [0], [1], [0, 0, 1, 1], [], []>} : vector<8x384xbf16>, vector<384x128xbf16>, vector<8x128xf32> -> vector<8x128xf32>
    %c0_3 = arith.constant 0 : index
    %c0_4 = arith.constant 0 : index
    %4 = vector.load %arg2[%c0_3, %c0_4] : memref<8x768xbf16, #tpu.memory_space<vmem>>, vector<8x768xbf16>
    %c0_5 = arith.constant 0 : index
    %c0_6 = arith.constant 0 : index
    %5 = vector.load %arg5[%c0_5, %c0_6] : memref<768x128xbf16, #tpu.memory_space<vmem>>, vector<768x128xbf16>
    %cst_7 = arith.constant dense<0.000000e+00> : vector<8x128xf32>
    %6 = tpu.matmul %4, %5, %cst_7 {dimension_numbers = #tpu.dot_dimension_numbers<[1], [0], [0], [1], [0, 0, 1, 1], [], []>} : vector<8x768xbf16>, vector<768x128xbf16>, vector<8x128xf32> -> vector<8x128xf32>
    %7 = arith.addf %3, %6 : vector<8x128xf32>
    %c0_8 = arith.constant 0 : index
    %c0_9 = arith.constant 0 : index
    %8 = vector.load %arg3[%c0_8, %c0_9] : memref<8x768xbf16, #tpu.memory_space<vmem>>, vector<8x768xbf16>
    %c0_10 = arith.constant 0 : index
    %c0_11 = arith.constant 0 : index
    %9 = vector.load %arg6[%c0_10, %c0_11] : memref<768x128xbf16, #tpu.memory_space<vmem>>, vector<768x128xbf16>
    %cst_12 = arith.constant dense<0.000000e+00> : vector<8x128xf32>
    %10 = tpu.matmul %8, %9, %cst_12 {dimension_numbers = #tpu.dot_dimension_numbers<[1], [0], [0], [1], [0, 0, 1, 1], [], []>} : vector<8x768xbf16>, vector<768x128xbf16>, vector<8x128xf32> -> vector<8x128xf32>
    %11 = arith.addf %7, %10 : vector<8x128xf32>
    %c0_13 = arith.constant 0 : index
    %c0_14 = arith.constant 0 : index
    %12 = vector.load %arg7[%c0_13, %c0_14] : memref<1x128xf32, #tpu.memory_space<vmem>>, vector<1x128xf32>
    %13 = vector.broadcast %12 : vector<1x128xf32> to vector<8x128xf32>
    %14 = arith.addf %11, %13 : vector<8x128xf32>
    %cst_15 = arith.constant 0.000000e+00 : f32
    %15 = vector.broadcast %cst_15 : f32 to vector<8x128xf32>
    %16 = arith.maximumf %14, %15 : vector<8x128xf32>
    %c0_16 = arith.constant 0 : index
    %c0_17 = arith.constant 0 : index
    %17 = vector.load %arg8[%c0_16, %c0_17] : memref<1x128xf32, #tpu.memory_space<vmem>>, vector<1x128xf32>
    %18 = vector.broadcast %17 : vector<1x128xf32> to vector<8x128xf32>
    %19 = arith.mulf %16, %18 : vector<8x128xf32>
    %cst_18 = arith.constant dense<0.000000e+00> : vector<8xf32>
    %20 = vector.multi_reduction <add>, %19, %cst_18 [1] : vector<8x128xf32> to vector<8xf32>
    %c0_19 = arith.constant 0 : index
    %21 = memref.load %arg9[%c0_19] : memref<1xf32, #tpu.memory_space<smem>>
    %22 = vector.broadcast %21 : f32 to vector<8xf32>
    %23 = arith.addf %20, %22 : vector<8xf32>
    %24 = vector.shape_cast %23 : vector<8xf32> to vector<1x8xf32>
    %c0_20 = arith.constant 0 : index
    %c0_21 = arith.constant 0 : index
    %25 = vector.load %arg10[%c0_20, %c0_21] : memref<1x8xf32, #tpu.memory_space<vmem>>, vector<1x8xf32>
    tpu.vector_store %arg10[%c0_20, %c0_21], %24 {strides = array<i32>} : memref<1x8xf32, #tpu.memory_space<vmem>>, vector<1x8xf32>,
    return
  }
  func.func @transform_0(%arg0: i32) -> (i32, i32) {
    %c0_i32 = arith.constant 0 : i32
    %c0_i32_0 = arith.constant 0 : i32
    return %arg0, %c0_i32 : i32, i32
  }
  func.func @transform_1(%arg0: i32) -> (i32, i32) {
    %c0_i32 = arith.constant 0 : i32
    %c0_i32_0 = arith.constant 0 : i32
    return %arg0, %c0_i32 : i32, i32
  }
  func.func @transform_2(%arg0: i32) -> (i32, i32) {
    %c0_i32 = arith.constant 0 : i32
    %c0_i32_0 = arith.constant 0 : i32
    return %arg0, %c0_i32 : i32, i32
  }
  func.func @transform_3(%arg0: i32) -> (i32, i32) {
    %c0_i32 = arith.constant 0 : i32
    %c0_i32_0 = arith.constant 0 : i32
    %c0_i32_1 = arith.constant 0 : i32
    return %c0_i32, %c0_i32_0 : i32, i32
  }
  func.func @transform_4(%arg0: i32) -> (i32, i32) {
    %c0_i32 = arith.constant 0 : i32
    %c0_i32_0 = arith.constant 0 : i32
    %c0_i32_1 = arith.constant 0 : i32
    return %c0_i32, %c0_i32_0 : i32, i32
  }
  func.func @transform_5(%arg0: i32) -> (i32, i32) {
    %c0_i32 = arith.constant 0 : i32
    %c0_i32_0 = arith.constant 0 : i32
    %c0_i32_1 = arith.constant 0 : i32
    return %c0_i32, %c0_i32_0 : i32, i32
  }
  func.func @transform_6(%arg0: i32) -> (i32, i32) {
    %c0_i32 = arith.constant 0 : i32
    %c0_i32_0 = arith.constant 0 : i32
    %c0_i32_1 = arith.constant 0 : i32
    return %c0_i32, %c0_i32_0 : i32, i32
  }
  func.func @transform_7(%arg0: i32) -> (i32, i32) {
    %c0_i32 = arith.constant 0 : i32
    %c0_i32_0 = arith.constant 0 : i32
    %c0_i32_1 = arith.constant 0 : i32
    return %c0_i32, %c0_i32_0 : i32, i32
  }
  func.func @transform_8(%arg0: i32) -> i32 {
    %c0_i32 = arith.constant 0 : i32
    %c0_i32_0 = arith.constant 0 : i32
    return %c0_i32 : i32
  }
  func.func @transform_9(%arg0: i32) -> (i32, i32) {
    %c0_i32 = arith.constant 0 : i32
    %c0_i32_0 = arith.constant 0 : i32
    return %arg0, %c0_i32 : i32, i32
  }
}

</mosaic_0001>

<llo_original>
// kernel: tpu_custom_call.1
$region0: #{tpu_custom_call.1}
  #allocation0 [shape = 'u32[]', space=smem, size = 0x4, offset = 0x4, fixed_abs, tag = 'smem constant byte address 0x4 - core index']
  #allocation1 [shape = 'u32[72,128]{1,0:T(1,128)}', space=vmem, size = 0x9000, scoped, tag = 'internal scratch']
  #allocation2 [shape = 'f32[1]{0:T(128)S(6)}', space=smem, size = 0x200, scoped, tag = 'scoped memory for tpu_custom_call.1']
  %s0 = inlined_call_operand.hbm [shape: f32[8,384], index: 0, kind: input, shape index: {}]
  %s1 = inlined_call_operand.hbm [shape: bf16[8,768], index: 1, kind: input, shape index: {}]
  %s2 = inlined_call_operand.hbm [shape: bf16[8,768], index: 2, kind: input, shape index: {}]
  %s3 = inlined_call_operand.hbm [shape: bf16[384,128], index: 3, kind: input, shape index: {}]
  %s4 = inlined_call_operand.hbm [shape: bf16[768,128], index: 4, kind: input, shape index: {}]
  %s5 = inlined_call_operand.hbm [shape: bf16[768,128], index: 5, kind: input, shape index: {}]
  %s6 = inlined_call_operand.vmem [shape: f32[1,128], index: 6, kind: input, shape index: {}]
  %s7 = inlined_call_operand.vmem [shape: f32[1,128], index: 7, kind: input, shape index: {}]
  %s8 = inlined_call_operand.<no memory space> [shape: f32[1], index: 8, kind: input, shape index: {}]
  %s9 = inlined_call_operand.hbm [shape: f32[1,8], index: 9, kind: output, shape index: {}]
  %s10 = sld [smem:[#allocation0]]
  $region70: #{tpu_custom_call.1} parent=0
    _
  %s12 = ssub.s32 1, %s10
  %s13 = scalar_select 0, %s12, %s10
  %14 = sst [smem:[#allocation2]] %s8
  $region1: #{tpu_custom_call.1} parent=0
    #allocation3 [shape = 'u8[12288]{0}', space=vmem, size = 0x3000, scoped, tag = 'input window, operand 0, single buffered']
    #allocation4 [shape = 's32[1]{0}', space=sflag, size = 0x4, scoped, tag = 'scoped memory for tpu_custom_call.1']
    #allocation5 [shape = 's32[1]{0}', space=sflag, size = 0x4, scoped, tag = 'scoped memory for tpu_custom_call.1']
    #allocation6 [shape = 'u8[12288]{0}', space=vmem, size = 0x3000, scoped, tag = 'input window, operand 1, single buffered']
    #allocation7 [shape = 's32[1]{0}', space=sflag, size = 0x4, scoped, tag = 'scoped memory for tpu_custom_call.1']
    #allocation8 [shape = 'u8[12288]{0}', space=vmem, size = 0x3000, scoped, tag = 'input window, operand 2, single buffered']
    #allocation9 [shape = 'u8[98304]{0}', space=vmem, size = 0x18000, scoped, tag = 'input window, operand 3, single buffered']
    #allocation10 [shape = 's32[1]{0}', space=sflag, size = 0x4, scoped, tag = 'scoped memory for tpu_custom_call.1']
    #allocation11 [shape = 'u8[196608]{0}', space=vmem, size = 0x30000, scoped, tag = 'input window, operand 4, single buffered']
    #allocation12 [shape = 'u8[196608]{0}', space=vmem, size = 0x30000, scoped, tag = 'input window, operand 5, single buffered']
    #allocation13 [shape = 's32[1]{0}', space=sflag, size = 0x4, scoped, tag = 'scoped memory for tpu_custom_call.1']
    #allocation14 [shape = 'u8[512]{0}', space=vmem, size = 0x400, scoped, tag = 'output window, operand 0, single buffered']
    %15 = vsyncpa [#allocation4], 0
    %16 = vsyncpa [#allocation7], 0
    %17 = vsyncpa [#allocation10], 0
    %18 = vsyncpa [#allocation13], 0
    %19 = vsyncpa [#allocation5], 0
    // Predicated region
    $region2: #{tpu_custom_call.1} parent=1 // pred_check
      _
    $region3: #{tpu_custom_call.1} parent=1 // pred_check_branch
      %21 = sbr.rel (0) target = $region5
    $region4: #{tpu_custom_call.1} parent=1 // pred_region
      %23 = vsyncadd [#allocation4], 0
      %s25 = sshll.u32 %s0, 4
      %s26 = int_to_ptr.hbm [resolvable:$true] %s25
      %s27 = sshll.u32 [#allocation3], 4
      %s28 = int_to_ptr.vmem [resolvable:$true] %s27
      %30 = dma.hbm_to_vmem [thread:$0]  %s26, 384, %s28, [#allocation4]
    $region5: #{tpu_custom_call.1} parent=1 // pred_fallthru
      _
    // Predicated region
    $region6: #{tpu_custom_call.1} parent=1 // pred_check
      _
    $region7: #{tpu_custom_call.1} parent=1 // pred_check_branch
      %32 = sbr.rel (0) target = $region9
    $region8: #{tpu_custom_call.1} parent=1 // pred_region
      %34 = vsyncadd [#allocation7], 0
      %s36 = sshll.u32 %s1, 4
      %s37 = int_to_ptr.hbm [resolvable:$true] %s36
      %s38 = sshll.u32 [#allocation6], 4
      %s39 = int_to_ptr.vmem [resolvable:$true] %s38
      %41 = dma.hbm_to_vmem [thread:$0]  %s37, 384, %s39, [#allocation7]
    $region9: #{tpu_custom_call.1} parent=1 // pred_fallthru
      _
    // Predicated region
    $region10: #{tpu_custom_call.1} parent=1 // pred_check
      _
    $region11: #{tpu_custom_call.1} parent=1 // pred_check_branch
      %43 = sbr.rel (0) target = $region13
    $region12: #{tpu_custom_call.1} parent=1 // pred_region
      %45 = vsyncadd [#allocation7], 0
      %s47 = sshll.u32 %s2, 4
      %s48 = int_to_ptr.hbm [resolvable:$true] %s47
      %s49 = sshll.u32 [#allocation8], 4
      %s50 = int_to_ptr.vmem [resolvable:$true] %s49
      %52 = dma.hbm_to_vmem [thread:$0]  %s48, 384, %s50, [#allocation7]
    $region13: #{tpu_custom_call.1} parent=1 // pred_fallthru
      _
    // Predicated region
    $region14: #{tpu_custom_call.1} parent=1 // pred_check
      _
    $region15: #{tpu_custom_call.1} parent=1 // pred_check_branch
      %54 = sbr.rel (0) target = $region17
    $region16: #{tpu_custom_call.1} parent=1 // pred_region
      %56 = vsyncadd [#allocation10], 0
      %s57 = sshll.u32 %s3, 4
      %s58 = int_to_ptr.hbm [resolvable:$true] %s57
      %s59 = sshll.u32 [#allocation9], 4
      %s60 = int_to_ptr.vmem [resolvable:$true] %s59
      %65 = dma.hbm_to_vmem [thread:$0]  %s58, 3072, %s60, [#allocation10], 64, 64, 4
    $region17: #{tpu_custom_call.1} parent=1 // pred_fallthru
      _
    // Predicated region
    $region18: #{tpu_custom_call.1} parent=1 // pred_check
      _
    $region19: #{tpu_custom_call.1} parent=1 // pred_check_branch
      %67 = sbr.rel (0) target = $region21
    $region20: #{tpu_custom_call.1} parent=1 // pred_region
      %69 = vsyncadd [#allocation10], 0
      %s70 = sshll.u32 %s4, 4
      %s71 = int_to_ptr.hbm [resolvable:$true] %s70
      %s72 = sshll.u32 [#allocation11], 4
      %s73 = int_to_ptr.vmem [resolvable:$true] %s72
      %78 = dma.hbm_to_vmem [thread:$0]  %s71, 6144, %s73, [#allocation10], 64, 64, 4
    $region21: #{tpu_custom_call.1} parent=1 // pred_fallthru
      _
    // Predicated region
    $region22: #{tpu_custom_call.1} parent=1 // pred_check
      _
    $region23: #{tpu_custom_call.1} parent=1 // pred_check_branch
      %80 = sbr.rel (0) target = $region25
    $region24: #{tpu_custom_call.1} parent=1 // pred_region
      %82 = vsyncadd [#allocation13], 0
      %s83 = sshll.u32 %s5, 4
      %s84 = int_to_ptr.hbm [resolvable:$true] %s83
      %s85 = sshll.u32 [#allocation12], 4
      %s86 = int_to_ptr.vmem [resolvable:$true] %s85
      %91 = dma.hbm_to_vmem [thread:$0]  %s84, 6144, %s86, [#allocation13], 64, 64, 4
    $region25: #{tpu_custom_call.1} parent=1 // pred_fallthru
      _
    // Predicated region
    $region26: #{tpu_custom_call.1} parent=1 // pred_check
      _
    $region27: #{tpu_custom_call.1} parent=1 // pred_check_branch
      %93 = sbr.rel (0) target = $region29
    $region28: #{tpu_custom_call.1} parent=1 // pred_region
      _
    $region29: #{tpu_custom_call.1} parent=1 // pred_fallthru
      _
    // Predicated region
    $region30: #{tpu_custom_call.1} parent=1 // pred_check
      _
    $region31: #{tpu_custom_call.1} parent=1 // pred_check_branch
      %95 = sbr.rel (0) target = $region33
    $region32: #{tpu_custom_call.1} parent=1 // pred_region
      _
    $region33: #{tpu_custom_call.1} parent=1 // pred_fallthru
      _
    // Predicated region
    $region34: #{tpu_custom_call.1} parent=1 // pred_check
      _
    $region35: #{tpu_custom_call.1} parent=1 // pred_check_branch
      %97 = sbr.rel (0) target = $region37
    $region36: #{tpu_custom_call.1} parent=1 // pred_region
      _
    $region37: #{tpu_custom_call.1} parent=1 // pred_fallthru
      _
    // Predicated region
    $region38: #{tpu_custom_call.1} parent=1 // pred_check
      _
    $region39: #{tpu_custom_call.1} parent=1 // pred_check_branch
      %99 = sbr.rel (0) target = $region41
    $region40: #{tpu_custom_call.1} parent=1 // pred_region
      %101 = dma.done [#allocation4], 384
    $region41: #{tpu_custom_call.1} parent=1 // pred_fallthru
      _
    // Predicated region
    $region42: #{tpu_custom_call.1} parent=1 // pred_check
      _
    $region43: #{tpu_custom_call.1} parent=1 // pred_check_branch
      %103 = sbr.rel (0) target = $region45
    $region44: #{tpu_custom_call.1} parent=1 // pred_region
      %105 = dma.done [#allocation7], 384
    $region45: #{tpu_custom_call.1} parent=1 // pred_fallthru
      _
    // Predicated region
    $region46: #{tpu_custom_call.1} parent=1 // pred_check
      _
    $region47: #{tpu_custom_call.1} parent=1 // pred_check_branch
      %107 = sbr.rel (0) target = $region49
    $region48: #{tpu_custom_call.1} parent=1 // pred_region
      %109 = dma.done [#allocation7], 384
    $region49: #{tpu_custom_call.1} parent=1 // pred_fallthru
      _
    // Predicated region
    $region50: #{tpu_custom_call.1} parent=1 // pred_check
      _
    $region51: #{tpu_custom_call.1} parent=1 // pred_check_branch
      %111 = sbr.rel (0) target = $region53
    $region52: #{tpu_custom_call.1} parent=1 // pred_region
      %113 = dma.done [#allocation10], 3072
    $region53: #{tpu_custom_call.1} parent=1 // pred_fallthru
      _
    // Predicated region
    $region54: #{tpu_custom_call.1} parent=1 // pred_check
      _
    $region55: #{tpu_custom_call.1} parent=1 // pred_check_branch
      %115 = sbr.rel (0) target = $region57
    $region56: #{tpu_custom_call.1} parent=1 // pred_region
      %117 = dma.done [#allocation10], 6144
    $region57: #{tpu_custom_call.1} parent=1 // pred_fallthru
      _
    // Predicated region
    $region58: #{tpu_custom_call.1} parent=1 // pred_check
      _
    $region59: #{tpu_custom_call.1} parent=1 // pred_check_branch
      %119 = sbr.rel (0) target = $region61
    $region60: #{tpu_custom_call.1} parent=1 // pred_region
      %121 = dma.done [#allocation13], 6144
    $region61: #{tpu_custom_call.1} parent=1 // pred_fallthru
      _
    %v122 = vld [vmem:[#allocation3] sm:$0xff]
    %v123 = vld [vmem:[#allocation3 + $0x8] sm:$0xff]
    %v124 = vld [vmem:[#allocation3 + $0x10] sm:$0xff]
    %v125 = vpack.c.bf16 %v122, %v122
    %v126 = vpack.c.bf16 %v123, %v123
    %v127 = vpack.c.bf16 %v124, %v124
    %v128 = vld [vmem:[#allocation9] sm:$0xf]
    %v129 = vld [vmem:[#allocation9 + $0x4] sm:$0xf]
    %v130 = vld [vmem:[#allocation9 + $0x8] sm:$0xf]
    %v131 = vld [vmem:[#allocation9 + $0xc] sm:$0xf]
    %v132 = vld [vmem:[#allocation9 + $0x10] sm:$0xf]
    %v133 = vld [vmem:[#allocation9 + $0x14] sm:$0xf]
    %v134 = vld [vmem:[#allocation9 + $0x18] sm:$0xf]
    %v135 = vld [vmem:[#allocation9 + $0x1c] sm:$0xf]
    %v136 = vld [vmem:[#allocation9 + $0x20] sm:$0xf]
    %v137 = vld [vmem:[#allocation9 + $0x24] sm:$0xf]
    %v138 = vld [vmem:[#allocation9 + $0x28] sm:$0xf]
    %v139 = vld [vmem:[#allocation9 + $0x2c] sm:$0xf]
    %v140 = vld [vmem:[#allocation9 + $0x30] sm:$0xf]
    %v141 = vld [vmem:[#allocation9 + $0x34] sm:$0xf]
    %v142 = vld [vmem:[#allocation9 + $0x38] sm:$0xf]
    %v143 = vld [vmem:[#allocation9 + $0x3c] sm:$0xf]
    %v144 = vld [vmem:[#allocation9 + $0x40] sm:$0xf]
    %v145 = vld [vmem:[#allocation9 + $0x44] sm:$0xf]
    %v146 = vld [vmem:[#allocation9 + $0x48] sm:$0xf]
    %v147 = vld [vmem:[#allocation9 + $0x4c] sm:$0xf]
    %v148 = vld [vmem:[#allocation9 + $0x50] sm:$0xf]
    %v149 = vld [vmem:[#allocation9 + $0x54] sm:$0xf]
    %v150 = vld [vmem:[#allocation9 + $0x58] sm:$0xf]
    %v151 = vld [vmem:[#allocation9 + $0x5c] sm:$0xf]
    %v152 = vld [vmem:[#allocation9 + $0x60] sm:$0xf]
    %v153 = vld [vmem:[#allocation9 + $0x64] sm:$0xf]
    %v154 = vld [vmem:[#allocation9 + $0x68] sm:$0xf]
    %v155 = vld [vmem:[#allocation9 + $0x6c] sm:$0xf]
    %v156 = vld [vmem:[#allocation9 + $0x70] sm:$0xf]
    %v157 = vld [vmem:[#allocation9 + $0x74] sm:$0xf]
    %v158 = vld [vmem:[#allocation9 + $0x78] sm:$0xf]
    %v159 = vld [vmem:[#allocation9 + $0x7c] sm:$0xf]
    %v160 = vld [vmem:[#allocation9 + $0x80] sm:$0xf]
    %v161 = vld [vmem:[#allocation9 + $0x84] sm:$0xf]
    %v162 = vld [vmem:[#allocation9 + $0x88] sm:$0xf]
    %v163 = vld [vmem:[#allocation9 + $0x8c] sm:$0xf]
    %v164 = vld [vmem:[#allocation9 + $0x90] sm:$0xf]
    %v165 = vld [vmem:[#allocation9 + $0x94] sm:$0xf]
    %v166 = vld [vmem:[#allocation9 + $0x98] sm:$0xf]
    %v167 = vld [vmem:[#allocation9 + $0x9c] sm:$0xf]
    %v168 = vld [vmem:[#allocation9 + $0xa0] sm:$0xf]
    %v169 = vld [vmem:[#allocation9 + $0xa4] sm:$0xf]
    %v170 = vld [vmem:[#allocation9 + $0xa8] sm:$0xf]
    %v171 = vld [vmem:[#allocation9 + $0xac] sm:$0xf]
    %v172 = vld [vmem:[#allocation9 + $0xb0] sm:$0xf]
    %v173 = vld [vmem:[#allocation9 + $0xb4] sm:$0xf]
    %v174 = vld [vmem:[#allocation9 + $0xb8] sm:$0xf]
    %v175 = vld [vmem:[#allocation9 + $0xbc] sm:$0xf]
    %v176 = vld [vmem:[#allocation6] sm:$0xff]
    %v177 = vld [vmem:[#allocation6 + $0x8] sm:$0xff]
    %v178 = vld [vmem:[#allocation6 + $0x10] sm:$0xff]
    %v179 = vld [vmem:[#allocation11] sm:$0xf]
    %v180 = vld [vmem:[#allocation11 + $0x4] sm:$0xf]
    %v181 = vld [vmem:[#allocation11 + $0x8] sm:$0xf]
    %v182 = vld [vmem:[#allocation11 + $0xc] sm:$0xf]
    %v183 = vld [vmem:[#allocation11 + $0x10] sm:$0xf]
    %v184 = vld [vmem:[#allocation11 + $0x14] sm:$0xf]
    %v185 = vld [vmem:[#allocation11 + $0x18] sm:$0xf]
    %v186 = vld [vmem:[#allocation11 + $0x1c] sm:$0xf]
    %v187 = vld [vmem:[#allocation11 + $0x20] sm:$0xf]
    %v188 = vld [vmem:[#allocation11 + $0x24] sm:$0xf]
    %v189 = vld [vmem:[#allocation11 + $0x28] sm:$0xf]
    %v190 = vld [vmem:[#allocation11 + $0x2c] sm:$0xf]
    %v191 = vld [vmem:[#allocation11 + $0x30] sm:$0xf]
    %v192 = vld [vmem:[#allocation11 + $0x34] sm:$0xf]
    %v193 = vld [vmem:[#allocation11 + $0x38] sm:$0xf]
    %v194 = vld [vmem:[#allocation11 + $0x3c] sm:$0xf]
    %v195 = vld [vmem:[#allocation11 + $0x40] sm:$0xf]
    %v196 = vld [vmem:[#allocation11 + $0x44] sm:$0xf]
    %v197 = vld [vmem:[#allocation11 + $0x48] sm:$0xf]
    %v198 = vld [vmem:[#allocation11 + $0x4c] sm:$0xf]
    %v199 = vld [vmem:[#allocation11 + $0x50] sm:$0xf]
    %v200 = vld [vmem:[#allocation11 + $0x54] sm:$0xf]
    %v201 = vld [vmem:[#allocation11 + $0x58] sm:$0xf]
    %v202 = vld [vmem:[#allocation11 + $0x5c] sm:$0xf]
    %v203 = vld [vmem:[#allocation11 + $0x60] sm:$0xf]
    %v204 = vld [vmem:[#allocation11 + $0x64] sm:$0xf]
    %v205 = vld [vmem:[#allocation11 + $0x68] sm:$0xf]
    %v206 = vld [vmem:[#allocation11 + $0x6c] sm:$0xf]
    %v207 = vld [vmem:[#allocation11 + $0x70] sm:$0xf]
    %v208 = vld [vmem:[#allocation11 + $0x74] sm:$0xf]
    %v209 = vld [vmem:[#allocation11 + $0x78] sm:$0xf]
    %v210 = vld [vmem:[#allocation11 + $0x7c] sm:$0xf]
    %v211 = vld [vmem:[#allocation11 + $0x80] sm:$0xf]
    %v212 = vld [vmem:[#allocation11 + $0x84] sm:$0xf]
    %v213 = vld [vmem:[#allocation11 + $0x88] sm:$0xf]
    %v214 = vld [vmem:[#allocation11 + $0x8c] sm:$0xf]
    %v215 = vld [vmem:[#allocation11 + $0x90] sm:$0xf]
    %v216 = vld [vmem:[#allocation11 + $0x94] sm:$0xf]
    %v217 = vld [vmem:[#allocation11 + $0x98] sm:$0xf]
    %v218 = vld [vmem:[#allocation11 + $0x9c] sm:$0xf]
    %v219 = vld [vmem:[#allocation11 + $0xa0] sm:$0xf]
    %v220 = vld [vmem:[#allocation11 + $0xa4] sm:$0xf]
    %v221 = vld [vmem:[#allocation11 + $0xa8] sm:$0xf]
    %v222 = vld [vmem:[#allocation11 + $0xac] sm:$0xf]
    %v223 = vld [vmem:[#allocation11 + $0xb0] sm:$0xf]
    %v224 = vld [vmem:[#allocation11 + $0xb4] sm:$0xf]
    %v225 = vld [vmem:[#allocation11 + $0xb8] sm:$0xf]
    %v226 = vld [vmem:[#allocation11 + $0xbc] sm:$0xf]
    %v227 = vld [vmem:[#allocation11 + $0xc0] sm:$0xf]
    %v228 = vld [vmem:[#allocation11 + $0xc4] sm:$0xf]
    %v229 = vld [vmem:[#allocation11 + $0xc8] sm:$0xf]
    %v230 = vld [vmem:[#allocation11 + $0xcc] sm:$0xf]
    %v231 = vld [vmem:[#allocation11 + $0xd0] sm:$0xf]
    %v232 = vld [vmem:[#allocation11 + $0xd4] sm:$0xf]
    %v233 = vld [vmem:[#allocation11 + $0xd8] sm:$0xf]
    %v234 = vld [vmem:[#allocation11 + $0xdc] sm:$0xf]
    %v235 = vld [vmem:[#allocation11 + $0xe0] sm:$0xf]
    %v236 = vld [vmem:[#allocation11 + $0xe4] sm:$0xf]
    %v237 = vld [vmem:[#allocation11 + $0xe8] sm:$0xf]
    %v238 = vld [vmem:[#allocation11 + $0xec] sm:$0xf]
    %v239 = vld [vmem:[#allocation11 + $0xf0] sm:$0xf]
    %v240 = vld [vmem:[#allocation11 + $0xf4] sm:$0xf]
    %v241 = vld [vmem:[#allocation11 + $0xf8] sm:$0xf]
    %v242 = vld [vmem:[#allocation11 + $0xfc] sm:$0xf]
    %v243 = vld [vmem:[#allocation11 + $0x100] sm:$0xf]
    %v244 = vld [vmem:[#allocation11 + $0x104] sm:$0xf]
    %v245 = vld [vmem:[#allocation11 + $0x108] sm:$0xf]
    %v246 = vld [vmem:[#allocation11 + $0x10c] sm:$0xf]
    %v247 = vld [vmem:[#allocation11 + $0x110] sm:$0xf]
    %v248 = vld [vmem:[#allocation11 + $0x114] sm:$0xf]
    %v249 = vld [vmem:[#allocation11 + $0x118] sm:$0xf]
    %v250 = vld [vmem:[#allocation11 + $0x11c] sm:$0xf]
    %v251 = vld [vmem:[#allocation11 + $0x120] sm:$0xf]
    %v252 = vld [vmem:[#allocation11 + $0x124] sm:$0xf]
    %v253 = vld [vmem:[#allocation11 + $0x128] sm:$0xf]
    %v254 = vld [vmem:[#allocation11 + $0x12c] sm:$0xf]
    %v255 = vld [vmem:[#allocation11 + $0x130] sm:$0xf]
    %v256 = vld [vmem:[#allocation11 + $0x134] sm:$0xf]
    %v257 = vld [vmem:[#allocation11 + $0x138] sm:$0xf]
    %v258 = vld [vmem:[#allocation11 + $0x13c] sm:$0xf]
    %v259 = vld [vmem:[#allocation11 + $0x140] sm:$0xf]
    %v260 = vld [vmem:[#allocation11 + $0x144] sm:$0xf]
    %v261 = vld [vmem:[#allocation11 + $0x148] sm:$0xf]
    %v262 = vld [vmem:[#allocation11 + $0x14c] sm:$0xf]
    %v263 = vld [vmem:[#allocation11 + $0x150] sm:$0xf]
    %v264 = vld [vmem:[#allocation11 + $0x154] sm:$0xf]
    %v265 = vld [vmem:[#allocation11 + $0x158] sm:$0xf]
    %v266 = vld [vmem:[#allocation11 + $0x15c] sm:$0xf]
    %v267 = vld [vmem:[#allocation11 + $0x160] sm:$0xf]
    %v268 = vld [vmem:[#allocation11 + $0x164] sm:$0xf]
    %v269 = vld [vmem:[#allocation11 + $0x168] sm:$0xf]
    %v270 = vld [vmem:[#allocation11 + $0x16c] sm:$0xf]
    %v271 = vld [vmem:[#allocation11 + $0x170] sm:$0xf]
    %v272 = vld [vmem:[#allocation11 + $0x174] sm:$0xf]
    %v273 = vld [vmem:[#allocation11 + $0x178] sm:$0xf]
    %v274 = vld [vmem:[#allocation11 + $0x17c] sm:$0xf]
    %v278 = vunpack.c.l.b16 %v176
    %v279 = vunpack.c.h.b16 %v176
    %v280 = vunpack.c.l.b16 %v177
    %v281 = vunpack.c.h.b16 %v177
    %v282 = vunpack.c.l.b16 %v178
    %v283 = vunpack.c.h.b16 %v178
    %v284 = vpack.c.b16 %v278, %v278
    %v285 = vpack.c.b16 %v279, %v279
    %v286 = vpack.c.b16 %v280, %v280
    %v287 = vpack.c.b16 %v281, %v281
    %v288 = vpack.c.b16 %v282, %v282
    %v289 = vpack.c.b16 %v283, %v283
    %v392 = vunpack.c.l.b16 %v179
    %v393 = vunpack.c.l.b16 %v180
    %v394 = vunpack.c.l.b16 %v181
    %v395 = vunpack.c.l.b16 %v182
    %v396 = vunpack.c.l.b16 %v183
    %v397 = vunpack.c.l.b16 %v184
    %v398 = vunpack.c.l.b16 %v185
    %v399 = vunpack.c.l.b16 %v186
    %v400 = vunpack.c.l.b16 %v187
    %v401 = vunpack.c.l.b16 %v188
    %v402 = vunpack.c.l.b16 %v189
    %v403 = vunpack.c.l.b16 %v190
    %v404 = vunpack.c.l.b16 %v191
    %v405 = vunpack.c.l.b16 %v192
    %v406 = vunpack.c.l.b16 %v193
    %v407 = vunpack.c.l.b16 %v194
    %v408 = vunpack.c.l.b16 %v195
    %v409 = vunpack.c.l.b16 %v196
    %v410 = vunpack.c.l.b16 %v197
    %v411 = vunpack.c.l.b16 %v198
    %v412 = vunpack.c.l.b16 %v199
    %v413 = vunpack.c.l.b16 %v200
    %v414 = vunpack.c.l.b16 %v201
    %v415 = vunpack.c.l.b16 %v202
    %v416 = vunpack.c.l.b16 %v203
    %v417 = vunpack.c.l.b16 %v204
    %v418 = vunpack.c.l.b16 %v205
    %v419 = vunpack.c.l.b16 %v206
    %v420 = vunpack.c.l.b16 %v207
    %v421 = vunpack.c.l.b16 %v208
    %v422 = vunpack.c.l.b16 %v209
    %v423 = vunpack.c.l.b16 %v210
    %v424 = vunpack.c.l.b16 %v211
    %v425 = vunpack.c.l.b16 %v212
    %v426 = vunpack.c.l.b16 %v213
    %v427 = vunpack.c.l.b16 %v214
    %v428 = vunpack.c.l.b16 %v215
    %v429 = vunpack.c.l.b16 %v216
    %v430 = vunpack.c.l.b16 %v217
    %v431 = vunpack.c.l.b16 %v218
    %v432 = vunpack.c.l.b16 %v219
    %v433 = vunpack.c.l.b16 %v220
    %v434 = vunpack.c.l.b16 %v221
    %v435 = vunpack.c.l.b16 %v222
    %v436 = vunpack.c.l.b16 %v223
    %v437 = vunpack.c.l.b16 %v224
    %v438 = vunpack.c.l.b16 %v225
    %v439 = vunpack.c.l.b16 %v226
    %v440 = vunpack.c.l.b16 %v227
    %v441 = vunpack.c.l.b16 %v228
    %v442 = vunpack.c.l.b16 %v229
    %v443 = vunpack.c.l.b16 %v230
    %v444 = vunpack.c.l.b16 %v231
    %v445 = vunpack.c.l.b16 %v232
    %v446 = vunpack.c.l.b16 %v233
    %v447 = vunpack.c.l.b16 %v234
    %v448 = vunpack.c.l.b16 %v235
    %v449 = vunpack.c.l.b16 %v236
    %v450 = vunpack.c.l.b16 %v237
    %v451 = vunpack.c.l.b16 %v238
    %v452 = vunpack.c.l.b16 %v239
    %v453 = vunpack.c.l.b16 %v240
    %v454 = vunpack.c.l.b16 %v241
    %v455 = vunpack.c.l.b16 %v242
    %v456 = vunpack.c.l.b16 %v243
    %v457 = vunpack.c.l.b16 %v244
    %v458 = vunpack.c.l.b16 %v245
    %v459 = vunpack.c.l.b16 %v246
    %v460 = vunpack.c.l.b16 %v247
    %v461 = vunpack.c.l.b16 %v248
    %v462 = vunpack.c.l.b16 %v249
    %v463 = vunpack.c.l.b16 %v250
    %v464 = vunpack.c.l.b16 %v251
    %v465 = vunpack.c.l.b16 %v252
    %v466 = vunpack.c.l.b16 %v253
    %v467 = vunpack.c.l.b16 %v254
    %v468 = vunpack.c.l.b16 %v255
    %v469 = vunpack.c.l.b16 %v256
    %v470 = vunpack.c.l.b16 %v257
    %v471 = vunpack.c.l.b16 %v258
    %v472 = vunpack.c.l.b16 %v259
    %v473 = vunpack.c.l.b16 %v260
    %v474 = vunpack.c.l.b16 %v261
    %v475 = vunpack.c.l.b16 %v262
    %v476 = vunpack.c.l.b16 %v263
    %v477 = vunpack.c.l.b16 %v264
    %v478 = vunpack.c.l.b16 %v265
    %v479 = vunpack.c.l.b16 %v266
    %v480 = vunpack.c.l.b16 %v267
    %v481 = vunpack.c.l.b16 %v268
    %v482 = vunpack.c.l.b16 %v269
    %v483 = vunpack.c.l.b16 %v270
    %v484 = vunpack.c.l.b16 %v271
    %v485 = vunpack.c.l.b16 %v272
    %v486 = vunpack.c.l.b16 %v273
    %v487 = vunpack.c.l.b16 %v274
    %v488 = vpack.c.b16 %v393, %v392
    %v489 = vpack.c.b16 %v395, %v394
    %v490 = vpack.c.b16 %v397, %v396
    %v491 = vpack.c.b16 %v399, %v398
    %v492 = vpack.c.b16 %v401, %v400
    %v493 = vpack.c.b16 %v403, %v402
    %v494 = vpack.c.b16 %v405, %v404
    %v495 = vpack.c.b16 %v407, %v406
    %v496 = vpack.c.b16 %v409, %v408
    %v497 = vpack.c.b16 %v411, %v410
    %v498 = vpack.c.b16 %v413, %v412
    %v499 = vpack.c.b16 %v415, %v414
    %v500 = vpack.c.b16 %v417, %v416
    %v501 = vpack.c.b16 %v419, %v418
    %v502 = vpack.c.b16 %v421, %v420
    %v503 = vpack.c.b16 %v423, %v422
    %v504 = vpack.c.b16 %v425, %v424
    %v505 = vpack.c.b16 %v427, %v426
    %v506 = vpack.c.b16 %v429, %v428
    %v507 = vpack.c.b16 %v431, %v430
    %v508 = vpack.c.b16 %v433, %v432
    %v509 = vpack.c.b16 %v435, %v434
    %v510 = vpack.c.b16 %v437, %v436
    %v511 = vpack.c.b16 %v439, %v438
    %v512 = vpack.c.b16 %v441, %v440
    %v513 = vpack.c.b16 %v443, %v442
    %v514 = vpack.c.b16 %v445, %v444
    %v515 = vpack.c.b16 %v447, %v446
    %v516 = vpack.c.b16 %v449, %v448
    %v517 = vpack.c.b16 %v451, %v450
    %v518 = vpack.c.b16 %v453, %v452
    %v519 = vpack.c.b16 %v455, %v454
    %v520 = vpack.c.b16 %v457, %v456
    %v521 = vpack.c.b16 %v459, %v458
    %v522 = vpack.c.b16 %v461, %v460
    %v523 = vpack.c.b16 %v463, %v462
    %v524 = vpack.c.b16 %v465, %v464
    %v525 = vpack.c.b16 %v467, %v466
    %v526 = vpack.c.b16 %v469, %v468
    %v527 = vpack.c.b16 %v471, %v470
    %v528 = vpack.c.b16 %v473, %v472
    %v529 = vpack.c.b16 %v475, %v474
    %v530 = vpack.c.b16 %v477, %v476
    %v531 = vpack.c.b16 %v479, %v478
    %v532 = vpack.c.b16 %v481, %v480
    %v533 = vpack.c.b16 %v483, %v482
    %v534 = vpack.c.b16 %v485, %v484
    %v535 = vpack.c.b16 %v487, %v486
    %584 = vmatpush.bf16.msra.mxu0 %v495
    %585 = vmatpush.bf16.msra.mxu0 %v494
    %586 = vmatpush.bf16.msra.mxu0 %v493
    %587 = vmatpush.bf16.msra.mxu0 %v492
    %588 = vmatpush.bf16.msra.mxu0 %v491
    %589 = vmatpush.bf16.msra.mxu0 %v490
    %590 = vmatpush.bf16.msra.mxu0 %v489
    %591 = vmatpush.bf16.msra.mxu0 %v488
    %592 = vmatmul.bf16.gmra.mxu0 %v284
    %v593 = vpop.f32.mrf.mxu0
    %v594 = vadd.f32 0.0, %v593
    %v595 = vpop.f32.mrf.mxu0
    %596 = vdwg.mxu0
    %597 = vmatpush.bf16.msra.mxu0 %v503
    %598 = vmatpush.bf16.msra.mxu0 %v502
    %599 = vmatpush.bf16.msra.mxu0 %v501
    %600 = vmatpush.bf16.msra.mxu0 %v500
    %601 = vmatpush.bf16.msra.mxu0 %v499
    %602 = vmatpush.bf16.msra.mxu0 %v498
    %603 = vmatpush.bf16.msra.mxu0 %v497
    %604 = vmatpush.bf16.msra.mxu0 %v496
    %605 = vmatmul.bf16.gmra.mxu0 %v285
    %v606 = vpop.f32.mrf.mxu0
    %v607 = vadd.f32 %v594, %v606
    %v608 = vpop.f32.mrf.mxu0
    %609 = vdwg.mxu0
    %610 = vmatpush.bf16.msra.mxu0 %v511
    %611 = vmatpush.bf16.msra.mxu0 %v510
    %612 = vmatpush.bf16.msra.mxu0 %v509
    %613 = vmatpush.bf16.msra.mxu0 %v508
    %614 = vmatpush.bf16.msra.mxu0 %v507
    %615 = vmatpush.bf16.msra.mxu0 %v506
    %616 = vmatpush.bf16.msra.mxu0 %v505
    %617 = vmatpush.bf16.msra.mxu0 %v504
    %618 = vmatmul.bf16.gmra.mxu0 %v286
    %v619 = vpop.f32.mrf.mxu0
    %v620 = vadd.f32 %v607, %v619
    %v621 = vpop.f32.mrf.mxu0
    %622 = vdwg.mxu0
    %623 = vmatpush.bf16.msra.mxu0 %v519
    %624 = vmatpush.bf16.msra.mxu0 %v518
    %625 = vmatpush.bf16.msra.mxu0 %v517
    %626 = vmatpush.bf16.msra.mxu0 %v516
    %627 = vmatpush.bf16.msra.mxu0 %v515
    %628 = vmatpush.bf16.msra.mxu0 %v514
    %629 = vmatpush.bf16.msra.mxu0 %v513
    %630 = vmatpush.bf16.msra.mxu0 %v512
    %631 = vmatmul.bf16.gmra.mxu0 %v287
    %v632 = vpop.f32.mrf.mxu0
    %v633 = vadd.f32 %v620, %v632
    %v634 = vpop.f32.mrf.mxu0
    %635 = vdwg.mxu0
    %636 = vmatpush.bf16.msra.mxu0 %v527
    %637 = vmatpush.bf16.msra.mxu0 %v526
    %638 = vmatpush.bf16.msra.mxu0 %v525
    %639 = vmatpush.bf16.msra.mxu0 %v524
    %640 = vmatpush.bf16.msra.mxu0 %v523
    %641 = vmatpush.bf16.msra.mxu0 %v522
    %642 = vmatpush.bf16.msra.mxu0 %v521
    %643 = vmatpush.bf16.msra.mxu0 %v520
    %644 = vmatmul.bf16.gmra.mxu0 %v288
    %v645 = vpop.f32.mrf.mxu0
    %v646 = vadd.f32 %v633, %v645
    %v647 = vpop.f32.mrf.mxu0
    %648 = vdwg.mxu0
    %649 = vmatpush.bf16.msra.mxu0 %v535
    %650 = vmatpush.bf16.msra.mxu0 %v534
    %651 = vmatpush.bf16.msra.mxu0 %v533
    %652 = vmatpush.bf16.msra.mxu0 %v532
    %653 = vmatpush.bf16.msra.mxu0 %v531
    %654 = vmatpush.bf16.msra.mxu0 %v530
    %655 = vmatpush.bf16.msra.mxu0 %v529
    %656 = vmatpush.bf16.msra.mxu0 %v528
    %657 = vmatmul.bf16.gmra.mxu0 %v289
    %v658 = vpop.f32.mrf.mxu0
    %v659 = vadd.f32 %v646, %v658
    %v660 = vpop.f32.mrf.mxu0
    %661 = vdwg.mxu0
    %v710 = vunpack.c.l.b16 %v128
    %v711 = vunpack.c.l.b16 %v129
    %v712 = vunpack.c.l.b16 %v130
    %v713 = vunpack.c.l.b16 %v131
    %v714 = vunpack.c.l.b16 %v132
    %v715 = vunpack.c.l.b16 %v133
    %v716 = vunpack.c.l.b16 %v134
    %v717 = vunpack.c.l.b16 %v135
    %v718 = vunpack.c.l.b16 %v136
    %v719 = vunpack.c.l.b16 %v137
    %v720 = vunpack.c.l.b16 %v138
    %v721 = vunpack.c.l.b16 %v139
    %v722 = vunpack.c.l.b16 %v140
    %v723 = vunpack.c.l.b16 %v141
    %v724 = vunpack.c.l.b16 %v142
    %v725 = vunpack.c.l.b16 %v143
    %v726 = vunpack.c.l.b16 %v144
    %v727 = vunpack.c.l.b16 %v145
    %v728 = vunpack.c.l.b16 %v146
    %v729 = vunpack.c.l.b16 %v147
    %v730 = vunpack.c.l.b16 %v148
    %v731 = vunpack.c.l.b16 %v149
    %v732 = vunpack.c.l.b16 %v150
    %v733 = vunpack.c.l.b16 %v151
    %v734 = vunpack.c.l.b16 %v152
    %v735 = vunpack.c.l.b16 %v153
    %v736 = vunpack.c.l.b16 %v154
    %v737 = vunpack.c.l.b16 %v155
    %v738 = vunpack.c.l.b16 %v156
    %v739 = vunpack.c.l.b16 %v157
    %v740 = vunpack.c.l.b16 %v158
    %v741 = vunpack.c.l.b16 %v159
    %v742 = vunpack.c.l.b16 %v160
    %v743 = vunpack.c.l.b16 %v161
    %v744 = vunpack.c.l.b16 %v162
    %v745 = vunpack.c.l.b16 %v163
    %v746 = vunpack.c.l.b16 %v164
    %v747 = vunpack.c.l.b16 %v165
    %v748 = vunpack.c.l.b16 %v166
    %v749 = vunpack.c.l.b16 %v167
    %v750 = vunpack.c.l.b16 %v168
    %v751 = vunpack.c.l.b16 %v169
    %v752 = vunpack.c.l.b16 %v170
    %v753 = vunpack.c.l.b16 %v171
    %v754 = vunpack.c.l.b16 %v172
    %v755 = vunpack.c.l.b16 %v173
    %v756 = vunpack.c.l.b16 %v174
    %v757 = vunpack.c.l.b16 %v175
    %v758 = vpack.c.b16 %v711, %v710
    %v759 = vpack.c.b16 %v713, %v712
    %v760 = vpack.c.b16 %v715, %v714
    %v761 = vpack.c.b16 %v717, %v716
    %v762 = vpack.c.b16 %v719, %v718
    %v763 = vpack.c.b16 %v721, %v720
    %v764 = vpack.c.b16 %v723, %v722
    %v765 = vpack.c.b16 %v725, %v724
    %v766 = vpack.c.b16 %v727, %v726
    %v767 = vpack.c.b16 %v729, %v728
    %v768 = vpack.c.b16 %v731, %v730
    %v769 = vpack.c.b16 %v733, %v732
    %v770 = vpack.c.b16 %v735, %v734
    %v771 = vpack.c.b16 %v737, %v736
    %v772 = vpack.c.b16 %v739, %v738
    %v773 = vpack.c.b16 %v741, %v740
    %v774 = vpack.c.b16 %v743, %v742
    %v775 = vpack.c.b16 %v745, %v744
    %v776 = vpack.c.b16 %v747, %v746
    %v777 = vpack.c.b16 %v749, %v748
    %v778 = vpack.c.b16 %v751, %v750
    %v779 = vpack.c.b16 %v753, %v752
    %v780 = vpack.c.b16 %v755, %v754
    %v781 = vpack.c.b16 %v757, %v756
    %806 = vmatpush.bf16.msra.mxu0 %v765
    %807 = vmatpush.bf16.msra.mxu0 %v764
    %808 = vmatpush.bf16.msra.mxu0 %v763
    %809 = vmatpush.bf16.msra.mxu0 %v762
    %810 = vmatpush.bf16.msra.mxu0 %v761
    %811 = vmatpush.bf16.msra.mxu0 %v760
    %812 = vmatpush.bf16.msra.mxu0 %v759
    %813 = vmatpush.bf16.msra.mxu0 %v758
    %814 = vmatmul.bf16.gmra.mxu0 %v125
    %v815 = vpop.f32.mrf.mxu0
    %v816 = vadd.f32 %v659, %v815
    %v817 = vpop.f32.mrf.mxu0
    %818 = vdwg.mxu0
    %819 = vmatpush.bf16.msra.mxu0 %v773
    %820 = vmatpush.bf16.msra.mxu0 %v772
    %821 = vmatpush.bf16.msra.mxu0 %v771
    %822 = vmatpush.bf16.msra.mxu0 %v770
    %823 = vmatpush.bf16.msra.mxu0 %v769
    %824 = vmatpush.bf16.msra.mxu0 %v768
    %825 = vmatpush.bf16.msra.mxu0 %v767
    %826 = vmatpush.bf16.msra.mxu0 %v766
    %827 = vmatmul.bf16.gmra.mxu0 %v126
    %v828 = vpop.f32.mrf.mxu0
    %v829 = vadd.f32 %v816, %v828
    %v830 = vpop.f32.mrf.mxu0
    %831 = vdwg.mxu0
    %832 = vmatpush.bf16.msra.mxu0 %v781
    %833 = vmatpush.bf16.msra.mxu0 %v780
    %834 = vmatpush.bf16.msra.mxu0 %v779
    %835 = vmatpush.bf16.msra.mxu0 %v778
    %836 = vmatpush.bf16.msra.mxu0 %v777
    %837 = vmatpush.bf16.msra.mxu0 %v776
    %838 = vmatpush.bf16.msra.mxu0 %v775
    %839 = vmatpush.bf16.msra.mxu0 %v774
    %840 = vmatmul.bf16.gmra.mxu0 %v127
    %v841 = vpop.f32.mrf.mxu0
    %v842 = vadd.f32 %v829, %v841
    %v843 = vpop.f32.mrf.mxu0
    %844 = vdwg.mxu0
    %v845 = vld [vmem:[#allocation8] sm:$0xff]
    %v846 = vld [vmem:[#allocation8 + $0x8] sm:$0xff]
    %v847 = vld [vmem:[#allocation8 + $0x10] sm:$0xff]
    %v848 = vld [vmem:[#allocation12] sm:$0xf]
    %v849 = vld [vmem:[#allocation12 + $0x4] sm:$0xf]
    %v850 = vld [vmem:[#allocation12 + $0x8] sm:$0xf]
    %v851 = vld [vmem:[#allocation12 + $0xc] sm:$0xf]
    %v852 = vld [vmem:[#allocation12 + $0x10] sm:$0xf]
    %v853 = vld [vmem:[#allocation12 + $0x14] sm:$0xf]
    %v854 = vld [vmem:[#allocation12 + $0x18] sm:$0xf]
    %v855 = vld [vmem:[#allocation12 + $0x1c] sm:$0xf]
    %v856 = vld [vmem:[#allocation12 + $0x20] sm:$0xf]
    %v857 = vld [vmem:[#allocation12 + $0x24] sm:$0xf]
    %v858 = vld [vmem:[#allocation12 + $0x28] sm:$0xf]
    %v859 = vld [vmem:[#allocation12 + $0x2c] sm:$0xf]
    %v860 = vld [vmem:[#allocation12 + $0x30] sm:$0xf]
    %v861 = vld [vmem:[#allocation12 + $0x34] sm:$0xf]
    %v862 = vld [vmem:[#allocation12 + $0x38] sm:$0xf]
    %v863 = vld [vmem:[#allocation12 + $0x3c] sm:$0xf]
    %v864 = vld [vmem:[#allocation12 + $0x40] sm:$0xf]
    %v865 = vld [vmem:[#allocation12 + $0x44] sm:$0xf]
    %v866 = vld [vmem:[#allocation12 + $0x48] sm:$0xf]
    %v867 = vld [vmem:[#allocation12 + $0x4c] sm:$0xf]
    %v868 = vld [vmem:[#allocation12 + $0x50] sm:$0xf]
    %v869 = vld [vmem:[#allocation12 + $0x54] sm:$0xf]
    %v870 = vld [vmem:[#allocation12 + $0x58] sm:$0xf]
    %v871 = vld [vmem:[#allocation12 + $0x5c] sm:$0xf]
    %v872 = vld [vmem:[#allocation12 + $0x60] sm:$0xf]
    %v873 = vld [vmem:[#allocation12 + $0x64] sm:$0xf]
    %v874 = vld [vmem:[#allocation12 + $0x68] sm:$0xf]
    %v875 = vld [vmem:[#allocation12 + $0x6c] sm:$0xf]
    %v876 = vld [vmem:[#allocation12 + $0x70] sm:$0xf]
    %v877 = vld [vmem:[#allocation12 + $0x74] sm:$0xf]
    %v878 = vld [vmem:[#allocation12 + $0x78] sm:$0xf]
    %v879 = vld [vmem:[#allocation12 + $0x7c] sm:$0xf]
    %v880 = vld [vmem:[#allocation12 + $0x80] sm:$0xf]
    %v881 = vld [vmem:[#allocation12 + $0x84] sm:$0xf]
    %v882 = vld [vmem:[#allocation12 + $0x88] sm:$0xf]
    %v883 = vld [vmem:[#allocation12 + $0x8c] sm:$0xf]
    %v884 = vld [vmem:[#allocation12 + $0x90] sm:$0xf]
    %v885 = vld [vmem:[#allocation12 + $0x94] sm:$0xf]
    %v886 = vld [vmem:[#allocation12 + $0x98] sm:$0xf]
    %v887 = vld [vmem:[#allocation12 + $0x9c] sm:$0xf]
    %v888 = vld [vmem:[#allocation12 + $0xa0] sm:$0xf]
    %v889 = vld [vmem:[#allocation12 + $0xa4] sm:$0xf]
    %v890 = vld [vmem:[#allocation12 + $0xa8] sm:$0xf]
    %v891 = vld [vmem:[#allocation12 + $0xac] sm:$0xf]
    %v892 = vld [vmem:[#allocation12 + $0xb0] sm:$0xf]
    %v893 = vld [vmem:[#allocation12 + $0xb4] sm:$0xf]
    %v894 = vld [vmem:[#allocation12 + $0xb8] sm:$0xf]
    %v895 = vld [vmem:[#allocation12 + $0xbc] sm:$0xf]
    %v896 = vld [vmem:[#allocation12 + $0xc0] sm:$0xf]
    %v897 = vld [vmem:[#allocation12 + $0xc4] sm:$0xf]
    %v898 = vld [vmem:[#allocation12 + $0xc8] sm:$0xf]
    %v899 = vld [vmem:[#allocation12 + $0xcc] sm:$0xf]
    %v900 = vld [vmem:[#allocation12 + $0xd0] sm:$0xf]
    %v901 = vld [vmem:[#allocation12 + $0xd4] sm:$0xf]
    %v902 = vld [vmem:[#allocation12 + $0xd8] sm:$0xf]
    %v903 = vld [vmem:[#allocation12 + $0xdc] sm:$0xf]
    %v904 = vld [vmem:[#allocation12 + $0xe0] sm:$0xf]
    %v905 = vld [vmem:[#allocation12 + $0xe4] sm:$0xf]
    %v906 = vld [vmem:[#allocation12 + $0xe8] sm:$0xf]
    %v907 = vld [vmem:[#allocation12 + $0xec] sm:$0xf]
    %v908 = vld [vmem:[#allocation12 + $0xf0] sm:$0xf]
    %v909 = vld [vmem:[#allocation12 + $0xf4] sm:$0xf]
    %v910 = vld [vmem:[#allocation12 + $0xf8] sm:$0xf]
    %v911 = vld [vmem:[#allocation12 + $0xfc] sm:$0xf]
    %v912 = vld [vmem:[#allocation12 + $0x100] sm:$0xf]
    %v913 = vld [vmem:[#allocation12 + $0x104] sm:$0xf]
    %v914 = vld [vmem:[#allocation12 + $0x108] sm:$0xf]
    %v915 = vld [vmem:[#allocation12 + $0x10c] sm:$0xf]
    %v916 = vld [vmem:[#allocation12 + $0x110] sm:$0xf]
    %v917 = vld [vmem:[#allocation12 + $0x114] sm:$0xf]
    %v918 = vld [vmem:[#allocation12 + $0x118] sm:$0xf]
    %v919 = vld [vmem:[#allocation12 + $0x11c] sm:$0xf]
    %v920 = vld [vmem:[#allocation12 + $0x120] sm:$0xf]
    %v921 = vld [vmem:[#allocation12 + $0x124] sm:$0xf]
    %v922 = vld [vmem:[#allocation12 + $0x128] sm:$0xf]
    %v923 = vld [vmem:[#allocation12 + $0x12c] sm:$0xf]
    %v924 = vld [vmem:[#allocation12 + $0x130] sm:$0xf]
    %v925 = vld [vmem:[#allocation12 + $0x134] sm:$0xf]
    %v926 = vld [vmem:[#allocation12 + $0x138] sm:$0xf]
    %v927 = vld [vmem:[#allocation12 + $0x13c] sm:$0xf]
    %v928 = vld [vmem:[#allocation12 + $0x140] sm:$0xf]
    %v929 = vld [vmem:[#allocation12 + $0x144] sm:$0xf]
    %v930 = vld [vmem:[#allocation12 + $0x148] sm:$0xf]
    %v931 = vld [vmem:[#allocation12 + $0x14c] sm:$0xf]
    %v932 = vld [vmem:[#allocation12 + $0x150] sm:$0xf]
    %v933 = vld [vmem:[#allocation12 + $0x154] sm:$0xf]
    %v934 = vld [vmem:[#allocation12 + $0x158] sm:$0xf]
    %v935 = vld [vmem:[#allocation12 + $0x15c] sm:$0xf]
    %v936 = vld [vmem:[#allocation12 + $0x160] sm:$0xf]
    %v937 = vld [vmem:[#allocation12 + $0x164] sm:$0xf]
    %v938 = vld [vmem:[#allocation12 + $0x168] sm:$0xf]
    %v939 = vld [vmem:[#allocation12 + $0x16c] sm:$0xf]
    %v940 = vld [vmem:[#allocation12 + $0x170] sm:$0xf]
    %v941 = vld [vmem:[#allocation12 + $0x174] sm:$0xf]
    %v942 = vld [vmem:[#allocation12 + $0x178] sm:$0xf]
    %v943 = vld [vmem:[#allocation12 + $0x17c] sm:$0xf]
    %v947 = vunpack.c.l.b16 %v845
    %v948 = vunpack.c.h.b16 %v845
    %v949 = vunpack.c.l.b16 %v846
    %v950 = vunpack.c.h.b16 %v846
    %v951 = vunpack.c.l.b16 %v847
    %v952 = vunpack.c.h.b16 %v847
    %v953 = vpack.c.b16 %v947, %v947
    %v954 = vpack.c.b16 %v948, %v948
    %v955 = vpack.c.b16 %v949, %v949
    %v956 = vpack.c.b16 %v950, %v950
    %v957 = vpack.c.b16 %v951, %v951
    %v958 = vpack.c.b16 %v952, %v952
    %v1061 = vunpack.c.l.b16 %v848
    %v1062 = vunpack.c.l.b16 %v849
    %v1063 = vunpack.c.l.b16 %v850
    %v1064 = vunpack.c.l.b16 %v851
    %v1065 = vunpack.c.l.b16 %v852
    %v1066 = vunpack.c.l.b16 %v853
    %v1067 = vunpack.c.l.b16 %v854
    %v1068 = vunpack.c.l.b16 %v855
    %v1069 = vunpack.c.l.b16 %v856
    %v1070 = vunpack.c.l.b16 %v857
    %v1071 = vunpack.c.l.b16 %v858
    %v1072 = vunpack.c.l.b16 %v859
    %v1073 = vunpack.c.l.b16 %v860
    %v1074 = vunpack.c.l.b16 %v861
    %v1075 = vunpack.c.l.b16 %v862
    %v1076 = vunpack.c.l.b16 %v863
    %v1077 = vunpack.c.l.b16 %v864
    %v1078 = vunpack.c.l.b16 %v865
    %v1079 = vunpack.c.l.b16 %v866
    %v1080 = vunpack.c.l.b16 %v867
    %v1081 = vunpack.c.l.b16 %v868
    %v1082 = vunpack.c.l.b16 %v869
    %v1083 = vunpack.c.l.b16 %v870
    %v1084 = vunpack.c.l.b16 %v871
    %v1085 = vunpack.c.l.b16 %v872
    %v1086 = vunpack.c.l.b16 %v873
    %v1087 = vunpack.c.l.b16 %v874
    %v1088 = vunpack.c.l.b16 %v875
    %v1089 = vunpack.c.l.b16 %v876
    %v1090 = vunpack.c.l.b16 %v877
    %v1091 = vunpack.c.l.b16 %v878
    %v1092 = vunpack.c.l.b16 %v879
    %v1093 = vunpack.c.l.b16 %v880
    %v1094 = vunpack.c.l.b16 %v881
    %v1095 = vunpack.c.l.b16 %v882
    %v1096 = vunpack.c.l.b16 %v883
    %v1097 = vunpack.c.l.b16 %v884
    %v1098 = vunpack.c.l.b16 %v885
    %v1099 = vunpack.c.l.b16 %v886
    %v1100 = vunpack.c.l.b16 %v887
    %v1101 = vunpack.c.l.b16 %v888
    %v1102 = vunpack.c.l.b16 %v889
    %v1103 = vunpack.c.l.b16 %v890
    %v1104 = vunpack.c.l.b16 %v891
    %v1105 = vunpack.c.l.b16 %v892
    %v1106 = vunpack.c.l.b16 %v893
    %v1107 = vunpack.c.l.b16 %v894
    %v1108 = vunpack.c.l.b16 %v895
    %v1109 = vunpack.c.l.b16 %v896
    %v1110 = vunpack.c.l.b16 %v897
    %v1111 = vunpack.c.l.b16 %v898
    %v1112 = vunpack.c.l.b16 %v899
    %v1113 = vunpack.c.l.b16 %v900
    %v1114 = vunpack.c.l.b16 %v901
    %v1115 = vunpack.c.l.b16 %v902
    %v1116 = vunpack.c.l.b16 %v903
    %v1117 = vunpack.c.l.b16 %v904
    %v1118 = vunpack.c.l.b16 %v905
    %v1119 = vunpack.c.l.b16 %v906
    %v1120 = vunpack.c.l.b16 %v907
    %v1121 = vunpack.c.l.b16 %v908
    %v1122 = vunpack.c.l.b16 %v909
    %v1123 = vunpack.c.l.b16 %v910
    %v1124 = vunpack.c.l.b16 %v911
    %v1125 = vunpack.c.l.b16 %v912
    %v1126 = vunpack.c.l.b16 %v913
    %v1127 = vunpack.c.l.b16 %v914
    %v1128 = vunpack.c.l.b16 %v915
    %v1129 = vunpack.c.l.b16 %v916
    %v1130 = vunpack.c.l.b16 %v917
    %v1131 = vunpack.c.l.b16 %v918
    %v1132 = vunpack.c.l.b16 %v919
    %v1133 = vunpack.c.l.b16 %v920
    %v1134 = vunpack.c.l.b16 %v921
    %v1135 = vunpack.c.l.b16 %v922
    %v1136 = vunpack.c.l.b16 %v923
    %v1137 = vunpack.c.l.b16 %v924
    %v1138 = vunpack.c.l.b16 %v925
    %v1139 = vunpack.c.l.b16 %v926
    %v1140 = vunpack.c.l.b16 %v927
    %v1141 = vunpack.c.l.b16 %v928
    %v1142 = vunpack.c.l.b16 %v929
    %v1143 = vunpack.c.l.b16 %v930
    %v1144 = vunpack.c.l.b16 %v931
    %v1145 = vunpack.c.l.b16 %v932
    %v1146 = vunpack.c.l.b16 %v933
    %v1147 = vunpack.c.l.b16 %v934
    %v1148 = vunpack.c.l.b16 %v935
    %v1149 = vunpack.c.l.b16 %v936
    %v1150 = vunpack.c.l.b16 %v937
    %v1151 = vunpack.c.l.b16 %v938
    %v1152 = vunpack.c.l.b16 %v939
    %v1153 = vunpack.c.l.b16 %v940
    %v1154 = vunpack.c.l.b16 %v941
    %v1155 = vunpack.c.l.b16 %v942
    %v1156 = vunpack.c.l.b16 %v943
    %v1157 = vpack.c.b16 %v1062, %v1061
    %v1158 = vpack.c.b16 %v1064, %v1063
    %v1159 = vpack.c.b16 %v1066, %v1065
    %v1160 = vpack.c.b16 %v1068, %v1067
    %v1161 = vpack.c.b16 %v1070, %v1069
    %v1162 = vpack.c.b16 %v1072, %v1071
    %v1163 = vpack.c.b16 %v1074, %v1073
    %v1164 = vpack.c.b16 %v1076, %v1075
    %v1165 = vpack.c.b16 %v1078, %v1077
    %v1166 = vpack.c.b16 %v1080, %v1079
    %v1167 = vpack.c.b16 %v1082, %v1081
    %v1168 = vpack.c.b16 %v1084, %v1083
    %v1169 = vpack.c.b16 %v1086, %v1085
    %v1170 = vpack.c.b16 %v1088, %v1087
    %v1171 = vpack.c.b16 %v1090, %v1089
    %v1172 = vpack.c.b16 %v1092, %v1091
    %v1173 = vpack.c.b16 %v1094, %v1093
    %v1174 = vpack.c.b16 %v1096, %v1095
    %v1175 = vpack.c.b16 %v1098, %v1097
    %v1176 = vpack.c.b16 %v1100, %v1099
    %v1177 = vpack.c.b16 %v1102, %v1101
    %v1178 = vpack.c.b16 %v1104, %v1103
    %v1179 = vpack.c.b16 %v1106, %v1105
    %v1180 = vpack.c.b16 %v1108, %v1107
    %v1181 = vpack.c.b16 %v1110, %v1109
    %v1182 = vpack.c.b16 %v1112, %v1111
    %v1183 = vpack.c.b16 %v1114, %v1113
    %v1184 = vpack.c.b16 %v1116, %v1115
    %v1185 = vpack.c.b16 %v1118, %v1117
    %v1186 = vpack.c.b16 %v1120, %v1119
    %v1187 = vpack.c.b16 %v1122, %v1121
    %v1188 = vpack.c.b16 %v1124, %v1123
    %v1189 = vpack.c.b16 %v1126, %v1125
    %v1190 = vpack.c.b16 %v1128, %v1127
    %v1191 = vpack.c.b16 %v1130, %v1129
    %v1192 = vpack.c.b16 %v1132, %v1131
    %v1193 = vpack.c.b16 %v1134, %v1133
    %v1194 = vpack.c.b16 %v1136, %v1135
    %v1195 = vpack.c.b16 %v1138, %v1137
    %v1196 = vpack.c.b16 %v1140, %v1139
    %v1197 = vpack.c.b16 %v1142, %v1141
    %v1198 = vpack.c.b16 %v1144, %v1143
    %v1199 = vpack.c.b16 %v1146, %v1145
    %v1200 = vpack.c.b16 %v1148, %v1147
    %v1201 = vpack.c.b16 %v1150, %v1149
    %v1202 = vpack.c.b16 %v1152, %v1151
    %v1203 = vpack.c.b16 %v1154, %v1153
    %v1204 = vpack.c.b16 %v1156, %v1155
    %1253 = vmatpush.bf16.msra.mxu0 %v1164
    %1254 = vmatpush.bf16.msra.mxu0 %v1163
    %1255 = vmatpush.bf16.msra.mxu0 %v1162
    %1256 = vmatpush.bf16.msra.mxu0 %v1161
    %1257 = vmatpush.bf16.msra.mxu0 %v1160
    %1258 = vmatpush.bf16.msra.mxu0 %v1159
    %1259 = vmatpush.bf16.msra.mxu0 %v1158
    %1260 = vmatpush.bf16.msra.mxu0 %v1157
    %1261 = vmatmul.bf16.gmra.mxu0 %v953
    %v1262 = vpop.f32.mrf.mxu0
    %v1263 = vadd.f32 0.0, %v1262
    %v1264 = vpop.f32.mrf.mxu0
    %1265 = vdwg.mxu0
    %1266 = vmatpush.bf16.msra.mxu0 %v1172
    %1267 = vmatpush.bf16.msra.mxu0 %v1171
    %1268 = vmatpush.bf16.msra.mxu0 %v1170
    %1269 = vmatpush.bf16.msra.mxu0 %v1169
    %1270 = vmatpush.bf16.msra.mxu0 %v1168
    %1271 = vmatpush.bf16.msra.mxu0 %v1167
    %1272 = vmatpush.bf16.msra.mxu0 %v1166
    %1273 = vmatpush.bf16.msra.mxu0 %v1165
    %1274 = vmatmul.bf16.gmra.mxu0 %v954
    %v1275 = vpop.f32.mrf.mxu0
    %v1276 = vadd.f32 %v1263, %v1275
    %v1277 = vpop.f32.mrf.mxu0
    %1278 = vdwg.mxu0
    %1279 = vmatpush.bf16.msra.mxu0 %v1180
    %1280 = vmatpush.bf16.msra.mxu0 %v1179
    %1281 = vmatpush.bf16.msra.mxu0 %v1178
    %1282 = vmatpush.bf16.msra.mxu0 %v1177
    %1283 = vmatpush.bf16.msra.mxu0 %v1176
    %1284 = vmatpush.bf16.msra.mxu0 %v1175
    %1285 = vmatpush.bf16.msra.mxu0 %v1174
    %1286 = vmatpush.bf16.msra.mxu0 %v1173
    %1287 = vmatmul.bf16.gmra.mxu0 %v955
    %v1288 = vpop.f32.mrf.mxu0
    %v1289 = vadd.f32 %v1276, %v1288
    %v1290 = vpop.f32.mrf.mxu0
    %1291 = vdwg.mxu0
    %1292 = vmatpush.bf16.msra.mxu0 %v1188
    %1293 = vmatpush.bf16.msra.mxu0 %v1187
    %1294 = vmatpush.bf16.msra.mxu0 %v1186
    %1295 = vmatpush.bf16.msra.mxu0 %v1185
    %1296 = vmatpush.bf16.msra.mxu0 %v1184
    %1297 = vmatpush.bf16.msra.mxu0 %v1183
    %1298 = vmatpush.bf16.msra.mxu0 %v1182
    %1299 = vmatpush.bf16.msra.mxu0 %v1181
    %1300 = vmatmul.bf16.gmra.mxu0 %v956
    %v1301 = vpop.f32.mrf.mxu0
    %v1302 = vadd.f32 %v1289, %v1301
    %v1303 = vpop.f32.mrf.mxu0
    %1304 = vdwg.mxu0
    %1305 = vmatpush.bf16.msra.mxu0 %v1196
    %1306 = vmatpush.bf16.msra.mxu0 %v1195
    %1307 = vmatpush.bf16.msra.mxu0 %v1194
    %1308 = vmatpush.bf16.msra.mxu0 %v1193
    %1309 = vmatpush.bf16.msra.mxu0 %v1192
    %1310 = vmatpush.bf16.msra.mxu0 %v1191
    %1311 = vmatpush.bf16.msra.mxu0 %v1190
    %1312 = vmatpush.bf16.msra.mxu0 %v1189
    %1313 = vmatmul.bf16.gmra.mxu0 %v957
    %v1314 = vpop.f32.mrf.mxu0
    %v1315 = vadd.f32 %v1302, %v1314
    %v1316 = vpop.f32.mrf.mxu0
    %1317 = vdwg.mxu0
    %1318 = vmatpush.bf16.msra.mxu0 %v1204
    %1319 = vmatpush.bf16.msra.mxu0 %v1203
    %1320 = vmatpush.bf16.msra.mxu0 %v1202
    %1321 = vmatpush.bf16.msra.mxu0 %v1201
    %1322 = vmatpush.bf16.msra.mxu0 %v1200
    %1323 = vmatpush.bf16.msra.mxu0 %v1199
    %1324 = vmatpush.bf16.msra.mxu0 %v1198
    %1325 = vmatpush.bf16.msra.mxu0 %v1197
    %1326 = vmatmul.bf16.gmra.mxu0 %v958
    %v1327 = vpop.f32.mrf.mxu0
    %v1328 = vadd.f32 %v1315, %v1327
    %v1329 = vpop.f32.mrf.mxu0
    %1330 = vdwg.mxu0
    %v1331 = vadd.f32 %v842, %v1328
    %v1332 = vld [vmem:[%s6] sm:$0x1]
    %v1334 = vperm.slane %v1332, 0
    %v1336 = vadd.f32 %v1331, %v1334
    %v1337 = vmax.f32 %v1336, 0.0
    %v1338 = vld [vmem:[%s7] sm:$0x1]
    %v1340 = vperm.slane %v1338, 0
    %v1342 = vmul.f32 %v1337, %v1340
    %1343 = vadd.xlane.f32.xlu0 %v1342
    %v1344 = vpop.xlane.xlu0 %1343
    %s1345 = sld [smem:[#allocation2]]
    %v1346 = vstv %s1345
    %v1347 = vadd.f32 %v1344, %v1346
    %v1349 = vlaneseq
    %v1350 = vand.u32 %v1349, 127
    %v1351 = vperm.slane %v1347, %v1350
    %vm1353 = vcmask 57344
    %1354 = vst.msk [vmem:[#allocation14] sm:$0x1] %vm1353, %v1351
    // Predicated region
    $region62: #{tpu_custom_call.1} parent=1 // pred_check
      _
    $region63: #{tpu_custom_call.1} parent=1 // pred_check_branch
      %1356 = sbr.rel (0) target = $region65
    $region64: #{tpu_custom_call.1} parent=1 // pred_region
      %1358 = vsyncadd [#allocation5], 0
      %s1360 = sshll.u32 [#allocation14], 4
      %s1361 = int_to_ptr.vmem [resolvable:$true] %s1360
      %s1362 = sshll.u32 %s9, 4
      %s1363 = int_to_ptr.hbm [resolvable:$true] %s1362
      %1365 = dma.vmem_to_hbm [thread:$0]  %s1361, 16, %s1363, [#allocation5]
    $region65: #{tpu_custom_call.1} parent=1 // pred_fallthru
      _
    // Predicated region
    $region66: #{tpu_custom_call.1} parent=1 // pred_check
      _
    $region67: #{tpu_custom_call.1} parent=1 // pred_check_branch
      %1367 = sbr.rel (0) target = $region69
    $region68: #{tpu_custom_call.1} parent=1 // pred_region
      %1369 = dma.done [#allocation5], 16
    $region69: #{tpu_custom_call.1} parent=1 // pred_fallthru
      _
    %1370 = vsyncpa [#allocation4], 1
    %1371 = vsyncpa [#allocation7], 1
    %1372 = vsyncpa [#allocation10], 1
    %1373 = vsyncpa [#allocation13], 1
    %1374 = vsyncpa [#allocation5], 1

</llo_original>
